<compile_context>
chip_gen: v7x
topology: tpu7x:2x2x1
jax: 0.10.0
libtpu: 0.0.40
codegen_flags: <defaults>
</compile_context>

<pallas_src>
import numpy as np

import jax
import jax.numpy as jnp
from jax.experimental import pallas as pl
from jax.experimental.pallas import tpu as pltpu


def make_wavefront_lstm_kernel(seq_len, batch, hidden):
    """Depth-2 wavefronted LSTM + FC head kernel.

    Ref order: x (T*B, D_pad) bf16, w_in (D_pad, 8H) bf16, w_step (2H, 8H) bf16,
               bias (1, 8H) f32, w_fc (H, O) bf16, b_fc (1, O) f32, out (B, O) f32.
    Gate-major column layout: [i0 i1 f0 f1 g0 g1 o0 o1], each H wide.
    """
    T, B, H = seq_len, batch, hidden

    def kernel(x_ref, w_in_ref, w_step_ref, bias_ref, w_fc_ref, b_fc_ref, out_ref):
        bias_row = bias_ref[...]                                   # (1, 8H) f32

        # Hoisted layer-0 input projection for all T steps (one matmul).
        # Layer-1 columns of w_in are zero, so those columns hold just b1.
        add_full = (
            jnp.dot(x_ref[...], w_in_ref[...],
                    preferred_element_type=jnp.float32)
            + bias_row
        )                                                          # (T*B, 8H) f32

        w_step = w_step_ref[...]                                   # (2H, 8H) bf16

        # Mask that keeps the layer-0 half of the state and zeroes layer-1.
        lane = jax.lax.broadcasted_iota(jnp.int32, (1, 2 * H), 1)
        mask_l0 = (lane < H).astype(jnp.float32)                   # (1, 2H)

        h = jnp.zeros((B, 2 * H), jnp.float32)                     # [h0 | h1]
        c = jnp.zeros((B, 2 * H), jnp.float32)                     # [c0 | c1]

        # Wavefront: step s -> layer-0 cell t=s (s<T), layer-1 cell t=s-1 (s>=1).
        for s in range(T + 1):
            if s == 0:
                gates = add_full[0:B, :]                           # h == 0
            else:
                fused = jnp.dot(h.astype(jnp.bfloat16), w_step,
                                preferred_element_type=jnp.float32)  # (B, 8H)
                if s < T:
                    gates = fused + add_full[s * B:(s + 1) * B, :]
                else:
                    gates = fused + bias_row                       # no x_T slice
            # One EUP pass over both layers' gates; sigmoid via prescaled cols.
            tg = jnp.tanh(gates)                                   # (B, 8H)
            sg = 0.5 * tg + 0.5
            i_g = sg[:, 0 * H:2 * H]                               # [i0 | i1]
            f_g = sg[:, 2 * H:4 * H]                               # [f0 | f1]
            g_g = tg[:, 4 * H:6 * H]                               # [g0 | g1]
            o_g = sg[:, 6 * H:8 * H]                               # [o0 | o1]
            c = f_g * c + i_g * g_g
            h = o_g * jnp.tanh(c)
            if s == 0:
                # Layer-1 cell t=-1 does not exist: keep its state at zero.
                c = c * mask_l0
                h = h * mask_l0
            # (At s == T the layer-0 half is garbage but never used again.)

        # FC head on the top layer's final hidden state h1(T-1).
        h_top = h[:, H:2 * H].astype(jnp.bfloat16)                 # (B, H)
        out = (
            jnp.dot(h_top, w_fc_ref[...], preferred_element_type=jnp.float32)
            + b_fc_ref[...]
        )
        out_ref[...] = out.astype(out_ref.dtype)

    return kernel


def pack_params(params, *, input_size, hidden_size, num_layers, output_size):
    """One-time weight packing (transpose, pad, gate-major interleave, 0.5
    prescale of i/f/o columns, bf16 cast, fused block matrix).  Keep the
    packed copies away from any other consumer — they are not the raw weights."""
    assert num_layers == 2, "only the depth-2 wavefront kernel is implemented"
    H = hidden_size
    D_pad = max(8, input_size)
    gate_scale = [0.5, 0.5, 1.0, 0.5]          # PyTorch gate order i, f, g, o

    def col(gi, layer):                        # gate-major 8H column offset
        return (2 * gi + layer) * H

    W_ih0, W_hh0, b_ih0, b_hh0 = [np.asarray(a, np.float32) for a in params["layers"][0]]
    W_ih1, W_hh1, b_ih1, b_hh1 = [np.asarray(a, np.float32) for a in params["layers"][1]]
    b0 = b_ih0 + b_hh0
    b1 = b_ih1 + b_hh1

    w_in = np.zeros((D_pad, 8 * H), np.float32)       # layer-0 input proj (l1 cols 0)
    w_step = np.zeros((2 * H, 8 * H), np.float32)     # [[W_hh0, W_ih1],[0, W_hh1]]
    bias = np.zeros((1, 8 * H), np.float32)
    for gi in range(4):
        rows = slice(gi * H, (gi + 1) * H)            # gate rows in PyTorch layout
        s = gate_scale[gi]
        c0 = slice(col(gi, 0), col(gi, 0) + H)        # layer-0 gate columns
        c1 = slice(col(gi, 1), col(gi, 1) + H)        # layer-1 gate columns
        w_in[:input_size, c0] = s * W_ih0[rows, :].T
        w_step[0:H, c0] = s * W_hh0[rows, :].T
        w_step[0:H, c1] = s * W_ih1[rows, :].T
        w_step[H:2 * H, c1] = s * W_hh1[rows, :].T
        bias[0, c0] = s * b0[rows]
        bias[0, c1] = s * b1[rows]

    w_fc = np.asarray(params["fc_w"], np.float32).T                 # (H, O)
    b_fc = np.asarray(params["fc_b"], np.float32).reshape(1, output_size)

    return {
        "w_in": jnp.asarray(w_in, jnp.bfloat16),
        "w_step": jnp.asarray(w_step, jnp.bfloat16),
        "bias": jnp.asarray(bias, jnp.float32),
        "w_fc": jnp.asarray(w_fc, jnp.bfloat16),
        "b_fc": jnp.asarray(b_fc, jnp.float32),
    }


@jax.jit
def _lstm_forward(x, w_in, w_step, bias, w_fc, b_fc):
    B, T, D = x.shape
    d_pad = w_in.shape[0]
    H = w_step.shape[0] // 2
    O = w_fc.shape[1]

    # (B,T,D) -> time-major (T*B, D_pad) bf16; fused inside this single jit
    # dispatch (no standalone per-call preprocessing ops).
    x_tb = jnp.transpose(x, (1, 0, 2)).astype(jnp.bfloat16)
    x_tb = jnp.pad(x_tb, ((0, 0), (0, 0), (0, d_pad - D))).reshape(T * B, d_pad)

    kernel = make_wavefront_lstm_kernel(T, B, H)
    vmem = pl.BlockSpec(memory_space=pltpu.MemorySpace.VMEM)
    return pl.pallas_call(
        kernel,
        out_shape=jax.ShapeDtypeStruct((B, O), jnp.float32),
        in_specs=[vmem] * 6,
        out_specs=vmem,
    )(x_tb, w_in, w_step, bias, w_fc, b_fc)


def lstm_model_pallas(x, packed):
    """Forward pass equivalent to LSTMModel.forward (PyTorch), depth-2."""
    return _lstm_forward(x, packed["w_in"], packed["w_step"], packed["bias"],
                         packed["w_fc"], packed["b_fc"])


def lstm_model_ref(x, params, *, hidden_size, num_layers, output_size):
    """Pure-JAX f32 reference matching torch.nn.LSTM + Linear semantics."""
    B, T, _ = x.shape
    h_in = x.astype(jnp.float32)
    for l in range(num_layers):
        W_ih, W_hh, b_ih, b_hh = params["layers"][l]
        h = jnp.zeros((B, hidden_size), jnp.float32)
        c = jnp.zeros((B, hidden_size), jnp.float32)
        outs = []
        for t in range(T):
            gates = h_in[:, t, :] @ W_ih.T + b_ih + h @ W_hh.T + b_hh
            i_g, f_g, g_g, o_g = jnp.split(gates, 4, axis=1)
            i_g = jax.nn.sigmoid(i_g)
            f_g = jax.nn.sigmoid(f_g)
            g_g = jnp.tanh(g_g)
            o_g = jax.nn.sigmoid(o_g)
            c = f_g * c + i_g * g_g
            h = o_g * jnp.tanh(c)
            outs.append(h)
        h_in = jnp.stack(outs, axis=1)
    return h_in[:, -1, :] @ params["fc_w"].T + params["fc_b"]


def init_params(key, input_size, hidden_size, num_layers, output_size):
    """Deterministic init matching PyTorch shapes (uniform(-1/sqrt(H), 1/sqrt(H)))."""
    k = 1.0 / np.sqrt(hidden_size)
    layers = []
    for l in range(num_layers):
        in_dim = input_size if l == 0 else hidden_size
        key, k1, k2, k3, k4 = jax.random.split(key, 5)
        W_ih = jax.random.uniform(k1, (4 * hidden_size, in_dim), jnp.float32, -k, k)
        W_hh = jax.random.uniform(k2, (4 * hidden_size, hidden_size), jnp.float32, -k, k)
        b_ih = jax.random.uniform(k3, (4 * hidden_size,), jnp.float32, -k, k)
        b_hh = jax.random.uniform(k4, (4 * hidden_size,), jnp.float32, -k, k)
        layers.append((W_ih, W_hh, b_ih, b_hh))
    key, k5, k6 = jax.random.split(key, 3)
    fc_w = jax.random.uniform(k5, (output_size, hidden_size), jnp.float32, -k, k)
    fc_b = jax.random.uniform(k6, (output_size,), jnp.float32, -k, k)
    return {"layers": layers, "fc_w": fc_w, "fc_b": fc_b}


if __name__ == "__main__":
    # Shapes implied by the module: input_size = len(selected_features) = 5.
    B, T = 8, 8
    INPUT_SIZE, HIDDEN_SIZE, NUM_LAYERS, OUTPUT_SIZE = 5, 32, 2, 1

    key = jax.random.PRNGKey(0)
    key, kx = jax.random.split(key)
    x = jax.random.normal(kx, (B, T, INPUT_SIZE), jnp.float32)

    params = init_params(key, INPUT_SIZE, HIDDEN_SIZE, NUM_LAYERS, OUTPUT_SIZE)
    packed = pack_params(params, input_size=INPUT_SIZE, hidden_size=HIDDEN_SIZE,
                         num_layers=NUM_LAYERS, output_size=OUTPUT_SIZE)

    out = lstm_model_pallas(x, packed)
    out = jax.block_until_ready(out)

    ref = lstm_model_ref(
        x, params,
        hidden_size=HIDDEN_SIZE, num_layers=NUM_LAYERS, output_size=OUTPUT_SIZE,
    )
    # bf16 MXU operands (f32 accumulation / gate math) -> loosened tolerance.
    np.testing.assert_allclose(np.asarray(out), np.asarray(ref), rtol=2e-2, atol=2e-2)

    print("KERNEL_OK")
</pallas_src>

<mosaic_0001>
module attributes {stable_mosaic.version = 11 : i64} {
  func.func @kernel(%arg0: memref<64x8xbf16, #tpu.memory_space<vmem>>, %arg1: memref<8x256xbf16, #tpu.memory_space<vmem>>, %arg2: memref<64x256xbf16, #tpu.memory_space<vmem>>, %arg3: memref<1x256xf32, #tpu.memory_space<vmem>>, %arg4: memref<32x1xbf16, #tpu.memory_space<vmem>>, %arg5: memref<1x1xf32, #tpu.memory_space<vmem>>, %arg6: memref<8x1xf32, #tpu.memory_space<vmem>>) attributes {dimension_semantics = [], scalar_prefetch = 0 : i64, scratch_operands = 0 : i64, tpu.core_type = #tpu.core_type<tc>} {
    %c0 = arith.constant 0 : index
    %c0_0 = arith.constant 0 : index
    %0 = vector.load %arg3[%c0, %c0_0] : memref<1x256xf32, #tpu.memory_space<vmem>>, vector<1x256xf32>
    %c0_1 = arith.constant 0 : index
    %c0_2 = arith.constant 0 : index
    %1 = vector.load %arg0[%c0_1, %c0_2] : memref<64x8xbf16, #tpu.memory_space<vmem>>, vector<64x8xbf16>
    %c0_3 = arith.constant 0 : index
    %c0_4 = arith.constant 0 : index
    %2 = vector.load %arg1[%c0_3, %c0_4] : memref<8x256xbf16, #tpu.memory_space<vmem>>, vector<8x256xbf16>
    %cst = arith.constant dense<0.000000e+00> : vector<64x256xf32>
    %3 = tpu.matmul %1, %2, %cst {dimension_numbers = #tpu.dot_dimension_numbers<[1], [0], [0], [1], [0, 0, 1, 1], [], []>} : vector<64x8xbf16>, vector<8x256xbf16>, vector<64x256xf32> -> vector<64x256xf32>
    %4 = vector.broadcast %0 : vector<1x256xf32> to vector<64x256xf32>
    %5 = arith.addf %3, %4 : vector<64x256xf32>
    %c0_5 = arith.constant 0 : index
    %c0_6 = arith.constant 0 : index
    %6 = vector.load %arg2[%c0_5, %c0_6] : memref<64x256xbf16, #tpu.memory_space<vmem>>, vector<64x256xbf16>
    %7 = tpu.iota {dimensions = array<i32: 1>} : vector<1x64xi32>
    %c32_i32 = arith.constant 32 : i32
    %8 = vector.broadcast %c32_i32 : i32 to vector<1x64xi32>
    %9 = arith.cmpi slt, %7, %8 : vector<1x64xi32>
    %10 = arith.extui %9 : vector<1x64xi1> to vector<1x64xi32>
    %11 = arith.sitofp %10 : vector<1x64xi32> to vector<1x64xf32>
    %cst_7 = arith.constant 0.000000e+00 : f32
    %12 = vector.broadcast %cst_7 : f32 to vector<8x64xf32>
    %13 = vector.extract_strided_slice %5 {offsets = [0, 0], sizes = [8, 256], strides = [1, 1]} : vector<64x256xf32> to vector<8x256xf32>
    %14 = math.tanh %13 : vector<8x256xf32>
    %cst_8 = arith.constant 5.000000e-01 : f32
    %15 = vector.broadcast %cst_8 : f32 to vector<8x256xf32>
    %16 = arith.mulf %15, %14 : vector<8x256xf32>
    %cst_9 = arith.constant 5.000000e-01 : f32
    %17 = vector.broadcast %cst_9 : f32 to vector<8x256xf32>
    %18 = arith.addf %16, %17 : vector<8x256xf32>
    %19 = vector.extract_strided_slice %18 {offsets = [0, 0], sizes = [8, 64], strides = [1, 1]} : vector<8x256xf32> to vector<8x64xf32>
    %20 = vector.extract_strided_slice %18 {offsets = [0, 64], sizes = [8, 64], strides = [1, 1]} : vector<8x256xf32> to vector<8x64xf32>
    %21 = vector.extract_strided_slice %14 {offsets = [0, 128], sizes = [8, 64], strides = [1, 1]} : vector<8x256xf32> to vector<8x64xf32>
    %22 = vector.extract_strided_slice %18 {offsets = [0, 192], sizes = [8, 64], strides = [1, 1]} : vector<8x256xf32> to vector<8x64xf32>
    %23 = arith.mulf %20, %12 : vector<8x64xf32>
    %24 = arith.mulf %19, %21 : vector<8x64xf32>
    %25 = arith.addf %23, %24 : vector<8x64xf32>
    %26 = math.tanh %25 : vector<8x64xf32>
    %27 = arith.mulf %22, %26 : vector<8x64xf32>
    %28 = vector.broadcast %11 : vector<1x64xf32> to vector<8x64xf32>
    %29 = arith.mulf %25, %28 : vector<8x64xf32>
    %30 = vector.broadcast %11 : vector<1x64xf32> to vector<8x64xf32>
    %31 = arith.mulf %27, %30 : vector<8x64xf32>
    %32 = arith.truncf %31 : vector<8x64xf32> to vector<8x64xbf16>
    %cst_10 = arith.constant dense<0.000000e+00> : vector<8x256xf32>
    %33 = tpu.matmul %32, %6, %cst_10 {dimension_numbers = #tpu.dot_dimension_numbers<[1], [0], [0], [1], [0, 0, 1, 1], [], []>} : vector<8x64xbf16>, vector<64x256xbf16>, vector<8x256xf32> -> vector<8x256xf32>
    %34 = vector.extract_strided_slice %5 {offsets = [8, 0], sizes = [8, 256], strides = [1, 1]} : vector<64x256xf32> to vector<8x256xf32>
    %35 = arith.addf %33, %34 : vector<8x256xf32>
    %36 = math.tanh %35 : vector<8x256xf32>
    %cst_11 = arith.constant 5.000000e-01 : f32
    %37 = vector.broadcast %cst_11 : f32 to vector<8x256xf32>
    %38 = arith.mulf %37, %36 : vector<8x256xf32>
    %cst_12 = arith.constant 5.000000e-01 : f32
    %39 = vector.broadcast %cst_12 : f32 to vector<8x256xf32>
    %40 = arith.addf %38, %39 : vector<8x256xf32>
    %41 = vector.extract_strided_slice %40 {offsets = [0, 0], sizes = [8, 64], strides = [1, 1]} : vector<8x256xf32> to vector<8x64xf32>
    %42 = vector.extract_strided_slice %40 {offsets = [0, 64], sizes = [8, 64], strides = [1, 1]} : vector<8x256xf32> to vector<8x64xf32>
    %43 = vector.extract_strided_slice %36 {offsets = [0, 128], sizes = [8, 64], strides = [1, 1]} : vector<8x256xf32> to vector<8x64xf32>
    %44 = vector.extract_strided_slice %40 {offsets = [0, 192], sizes = [8, 64], strides = [1, 1]} : vector<8x256xf32> to vector<8x64xf32>
    %45 = arith.mulf %42, %29 : vector<8x64xf32>
    %46 = arith.mulf %41, %43 : vector<8x64xf32>
    %47 = arith.addf %45, %46 : vector<8x64xf32>
    %48 = math.tanh %47 : vector<8x64xf32>
    %49 = arith.mulf %44, %48 : vector<8x64xf32>
    %50 = arith.truncf %49 : vector<8x64xf32> to vector<8x64xbf16>
    %cst_13 = arith.constant dense<0.000000e+00> : vector<8x256xf32>
    %51 = tpu.matmul %50, %6, %cst_13 {dimension_numbers = #tpu.dot_dimension_numbers<[1], [0], [0], [1], [0, 0, 1, 1], [], []>} : vector<8x64xbf16>, vector<64x256xbf16>, vector<8x256xf32> -> vector<8x256xf32>
    %52 = vector.extract_strided_slice %5 {offsets = [16, 0], sizes = [8, 256], strides = [1, 1]} : vector<64x256xf32> to vector<8x256xf32>
    %53 = arith.addf %51, %52 : vector<8x256xf32>
    %54 = math.tanh %53 : vector<8x256xf32>
    %cst_14 = arith.constant 5.000000e-01 : f32
    %55 = vector.broadcast %cst_14 : f32 to vector<8x256xf32>
    %56 = arith.mulf %55, %54 : vector<8x256xf32>
    %cst_15 = arith.constant 5.000000e-01 : f32
    %57 = vector.broadcast %cst_15 : f32 to vector<8x256xf32>
    %58 = arith.addf %56, %57 : vector<8x256xf32>
    %59 = vector.extract_strided_slice %58 {offsets = [0, 0], sizes = [8, 64], strides = [1, 1]} : vector<8x256xf32> to vector<8x64xf32>
    %60 = vector.extract_strided_slice %58 {offsets = [0, 64], sizes = [8, 64], strides = [1, 1]} : vector<8x256xf32> to vector<8x64xf32>
    %61 = vector.extract_strided_slice %54 {offsets = [0, 128], sizes = [8, 64], strides = [1, 1]} : vector<8x256xf32> to vector<8x64xf32>
    %62 = vector.extract_strided_slice %58 {offsets = [0, 192], sizes = [8, 64], strides = [1, 1]} : vector<8x256xf32> to vector<8x64xf32>
    %63 = arith.mulf %60, %47 : vector<8x64xf32>
    %64 = arith.mulf %59, %61 : vector<8x64xf32>
    %65 = arith.addf %63, %64 : vector<8x64xf32>
    %66 = math.tanh %65 : vector<8x64xf32>
    %67 = arith.mulf %62, %66 : vector<8x64xf32>
    %68 = arith.truncf %67 : vector<8x64xf32> to vector<8x64xbf16>
    %cst_16 = arith.constant dense<0.000000e+00> : vector<8x256xf32>
    %69 = tpu.matmul %68, %6, %cst_16 {dimension_numbers = #tpu.dot_dimension_numbers<[1], [0], [0], [1], [0, 0, 1, 1], [], []>} : vector<8x64xbf16>, vector<64x256xbf16>, vector<8x256xf32> -> vector<8x256xf32>
    %70 = vector.extract_strided_slice %5 {offsets = [24, 0], sizes = [8, 256], strides = [1, 1]} : vector<64x256xf32> to vector<8x256xf32>
    %71 = arith.addf %69, %70 : vector<8x256xf32>
    %72 = math.tanh %71 : vector<8x256xf32>
    %cst_17 = arith.constant 5.000000e-01 : f32
    %73 = vector.broadcast %cst_17 : f32 to vector<8x256xf32>
    %74 = arith.mulf %73, %72 : vector<8x256xf32>
    %cst_18 = arith.constant 5.000000e-01 : f32
    %75 = vector.broadcast %cst_18 : f32 to vector<8x256xf32>
    %76 = arith.addf %74, %75 : vector<8x256xf32>
    %77 = vector.extract_strided_slice %76 {offsets = [0, 0], sizes = [8, 64], strides = [1, 1]} : vector<8x256xf32> to vector<8x64xf32>
    %78 = vector.extract_strided_slice %76 {offsets = [0, 64], sizes = [8, 64], strides = [1, 1]} : vector<8x256xf32> to vector<8x64xf32>
    %79 = vector.extract_strided_slice %72 {offsets = [0, 128], sizes = [8, 64], strides = [1, 1]} : vector<8x256xf32> to vector<8x64xf32>
    %80 = vector.extract_strided_slice %76 {offsets = [0, 192], sizes = [8, 64], strides = [1, 1]} : vector<8x256xf32> to vector<8x64xf32>
    %81 = arith.mulf %78, %65 : vector<8x64xf32>
    %82 = arith.mulf %77, %79 : vector<8x64xf32>
    %83 = arith.addf %81, %82 : vector<8x64xf32>
    %84 = math.tanh %83 : vector<8x64xf32>
    %85 = arith.mulf %80, %84 : vector<8x64xf32>
    %86 = arith.truncf %85 : vector<8x64xf32> to vector<8x64xbf16>
    %cst_19 = arith.constant dense<0.000000e+00> : vector<8x256xf32>
    %87 = tpu.matmul %86, %6, %cst_19 {dimension_numbers = #tpu.dot_dimension_numbers<[1], [0], [0], [1], [0, 0, 1, 1], [], []>} : vector<8x64xbf16>, vector<64x256xbf16>, vector<8x256xf32> -> vector<8x256xf32>
    %88 = vector.extract_strided_slice %5 {offsets = [32, 0], sizes = [8, 256], strides = [1, 1]} : vector<64x256xf32> to vector<8x256xf32>
    %89 = arith.addf %87, %88 : vector<8x256xf32>
    %90 = math.tanh %89 : vector<8x256xf32>
    %cst_20 = arith.constant 5.000000e-01 : f32
    %91 = vector.broadcast %cst_20 : f32 to vector<8x256xf32>
    %92 = arith.mulf %91, %90 : vector<8x256xf32>
    %cst_21 = arith.constant 5.000000e-01 : f32
    %93 = vector.broadcast %cst_21 : f32 to vector<8x256xf32>
    %94 = arith.addf %92, %93 : vector<8x256xf32>
    %95 = vector.extract_strided_slice %94 {offsets = [0, 0], sizes = [8, 64], strides = [1, 1]} : vector<8x256xf32> to vector<8x64xf32>
    %96 = vector.extract_strided_slice %94 {offsets = [0, 64], sizes = [8, 64], strides = [1, 1]} : vector<8x256xf32> to vector<8x64xf32>
    %97 = vector.extract_strided_slice %90 {offsets = [0, 128], sizes = [8, 64], strides = [1, 1]} : vector<8x256xf32> to vector<8x64xf32>
    %98 = vector.extract_strided_slice %94 {offsets = [0, 192], sizes = [8, 64], strides = [1, 1]} : vector<8x256xf32> to vector<8x64xf32>
    %99 = arith.mulf %96, %83 : vector<8x64xf32>
    %100 = arith.mulf %95, %97 : vector<8x64xf32>
    %101 = arith.addf %99, %100 : vector<8x64xf32>
    %102 = math.tanh %101 : vector<8x64xf32>
    %103 = arith.mulf %98, %102 : vector<8x64xf32>
    %104 = arith.truncf %103 : vector<8x64xf32> to vector<8x64xbf16>
    %cst_22 = arith.constant dense<0.000000e+00> : vector<8x256xf32>
    %105 = tpu.matmul %104, %6, %cst_22 {dimension_numbers = #tpu.dot_dimension_numbers<[1], [0], [0], [1], [0, 0, 1, 1], [], []>} : vector<8x64xbf16>, vector<64x256xbf16>, vector<8x256xf32> -> vector<8x256xf32>
    %106 = vector.extract_strided_slice %5 {offsets = [40, 0], sizes = [8, 256], strides = [1, 1]} : vector<64x256xf32> to vector<8x256xf32>
    %107 = arith.addf %105, %106 : vector<8x256xf32>
    %108 = math.tanh %107 : vector<8x256xf32>
    %cst_23 = arith.constant 5.000000e-01 : f32
    %109 = vector.broadcast %cst_23 : f32 to vector<8x256xf32>
    %110 = arith.mulf %109, %108 : vector<8x256xf32>
    %cst_24 = arith.constant 5.000000e-01 : f32
    %111 = vector.broadcast %cst_24 : f32 to vector<8x256xf32>
    %112 = arith.addf %110, %111 : vector<8x256xf32>
    %113 = vector.extract_strided_slice %112 {offsets = [0, 0], sizes = [8, 64], strides = [1, 1]} : vector<8x256xf32> to vector<8x64xf32>
    %114 = vector.extract_strided_slice %112 {offsets = [0, 64], sizes = [8, 64], strides = [1, 1]} : vector<8x256xf32> to vector<8x64xf32>
    %115 = vector.extract_strided_slice %108 {offsets = [0, 128], sizes = [8, 64], strides = [1, 1]} : vector<8x256xf32> to vector<8x64xf32>
    %116 = vector.extract_strided_slice %112 {offsets = [0, 192], sizes = [8, 64], strides = [1, 1]} : vector<8x256xf32> to vector<8x64xf32>
    %117 = arith.mulf %114, %101 : vector<8x64xf32>
    %118 = arith.mulf %113, %115 : vector<8x64xf32>
    %119 = arith.addf %117, %118 : vector<8x64xf32>
    %120 = math.tanh %119 : vector<8x64xf32>
    %121 = arith.mulf %116, %120 : vector<8x64xf32>
    %122 = arith.truncf %121 : vector<8x64xf32> to vector<8x64xbf16>
    %cst_25 = arith.constant dense<0.000000e+00> : vector<8x256xf32>
    %123 = tpu.matmul %122, %6, %cst_25 {dimension_numbers = #tpu.dot_dimension_numbers<[1], [0], [0], [1], [0, 0, 1, 1], [], []>} : vector<8x64xbf16>, vector<64x256xbf16>, vector<8x256xf32> -> vector<8x256xf32>
    %124 = vector.extract_strided_slice %5 {offsets = [48, 0], sizes = [8, 256], strides = [1, 1]} : vector<64x256xf32> to vector<8x256xf32>
    %125 = arith.addf %123, %124 : vector<8x256xf32>
    %126 = math.tanh %125 : vector<8x256xf32>
    %cst_26 = arith.constant 5.000000e-01 : f32
    %127 = vector.broadcast %cst_26 : f32 to vector<8x256xf32>
    %128 = arith.mulf %127, %126 : vector<8x256xf32>
    %cst_27 = arith.constant 5.000000e-01 : f32
    %129 = vector.broadcast %cst_27 : f32 to vector<8x256xf32>
    %130 = arith.addf %128, %129 : vector<8x256xf32>
    %131 = vector.extract_strided_slice %130 {offsets = [0, 0], sizes = [8, 64], strides = [1, 1]} : vector<8x256xf32> to vector<8x64xf32>
    %132 = vector.extract_strided_slice %130 {offsets = [0, 64], sizes = [8, 64], strides = [1, 1]} : vector<8x256xf32> to vector<8x64xf32>
    %133 = vector.extract_strided_slice %126 {offsets = [0, 128], sizes = [8, 64], strides = [1, 1]} : vector<8x256xf32> to vector<8x64xf32>
    %134 = vector.extract_strided_slice %130 {offsets = [0, 192], sizes = [8, 64], strides = [1, 1]} : vector<8x256xf32> to vector<8x64xf32>
    %135 = arith.mulf %132, %119 : vector<8x64xf32>
    %136 = arith.mulf %131, %133 : vector<8x64xf32>
    %137 = arith.addf %135, %136 : vector<8x64xf32>
    %138 = math.tanh %137 : vector<8x64xf32>
    %139 = arith.mulf %134, %138 : vector<8x64xf32>
    %140 = arith.truncf %139 : vector<8x64xf32> to vector<8x64xbf16>
    %cst_28 = arith.constant dense<0.000000e+00> : vector<8x256xf32>
    %141 = tpu.matmul %140, %6, %cst_28 {dimension_numbers = #tpu.dot_dimension_numbers<[1], [0], [0], [1], [0, 0, 1, 1], [], []>} : vector<8x64xbf16>, vector<64x256xbf16>, vector<8x256xf32> -> vector<8x256xf32>
    %142 = vector.extract_strided_slice %5 {offsets = [56, 0], sizes = [8, 256], strides = [1, 1]} : vector<64x256xf32> to vector<8x256xf32>
    %143 = arith.addf %141, %142 : vector<8x256xf32>
    %144 = math.tanh %143 : vector<8x256xf32>
    %cst_29 = arith.constant 5.000000e-01 : f32
    %145 = vector.broadcast %cst_29 : f32 to vector<8x256xf32>
    %146 = arith.mulf %145, %144 : vector<8x256xf32>
    %cst_30 = arith.constant 5.000000e-01 : f32
    %147 = vector.broadcast %cst_30 : f32 to vector<8x256xf32>
    %148 = arith.addf %146, %147 : vector<8x256xf32>
    %149 = vector.extract_strided_slice %148 {offsets = [0, 0], sizes = [8, 64], strides = [1, 1]} : vector<8x256xf32> to vector<8x64xf32>
    %150 = vector.extract_strided_slice %148 {offsets = [0, 64], sizes = [8, 64], strides = [1, 1]} : vector<8x256xf32> to vector<8x64xf32>
    %151 = vector.extract_strided_slice %144 {offsets = [0, 128], sizes = [8, 64], strides = [1, 1]} : vector<8x256xf32> to vector<8x64xf32>
    %152 = vector.extract_strided_slice %148 {offsets = [0, 192], sizes = [8, 64], strides = [1, 1]} : vector<8x256xf32> to vector<8x64xf32>
    %153 = arith.mulf %150, %137 : vector<8x64xf32>
    %154 = arith.mulf %149, %151 : vector<8x64xf32>
    %155 = arith.addf %153, %154 : vector<8x64xf32>
    %156 = math.tanh %155 : vector<8x64xf32>
    %157 = arith.mulf %152, %156 : vector<8x64xf32>
    %158 = arith.truncf %157 : vector<8x64xf32> to vector<8x64xbf16>
    %cst_31 = arith.constant dense<0.000000e+00> : vector<8x256xf32>
    %159 = tpu.matmul %158, %6, %cst_31 {dimension_numbers = #tpu.dot_dimension_numbers<[1], [0], [0], [1], [0, 0, 1, 1], [], []>} : vector<8x64xbf16>, vector<64x256xbf16>, vector<8x256xf32> -> vector<8x256xf32>
    %160 = vector.broadcast %0 : vector<1x256xf32> to vector<8x256xf32>
    %161 = arith.addf %159, %160 : vector<8x256xf32>
    %162 = math.tanh %161 : vector<8x256xf32>
    %cst_32 = arith.constant 5.000000e-01 : f32
    %163 = vector.broadcast %cst_32 : f32 to vector<8x256xf32>
    %164 = arith.mulf %163, %162 : vector<8x256xf32>
    %cst_33 = arith.constant 5.000000e-01 : f32
    %165 = vector.broadcast %cst_33 : f32 to vector<8x256xf32>
    %166 = arith.addf %164, %165 : vector<8x256xf32>
    %167 = vector.extract_strided_slice %166 {offsets = [0, 0], sizes = [8, 64], strides = [1, 1]} : vector<8x256xf32> to vector<8x64xf32>
    %168 = vector.extract_strided_slice %166 {offsets = [0, 64], sizes = [8, 64], strides = [1, 1]} : vector<8x256xf32> to vector<8x64xf32>
    %169 = vector.extract_strided_slice %162 {offsets = [0, 128], sizes = [8, 64], strides = [1, 1]} : vector<8x256xf32> to vector<8x64xf32>
    %170 = vector.extract_strided_slice %166 {offsets = [0, 192], sizes = [8, 64], strides = [1, 1]} : vector<8x256xf32> to vector<8x64xf32>
    %171 = arith.mulf %168, %155 : vector<8x64xf32>
    %172 = arith.mulf %167, %169 : vector<8x64xf32>
    %173 = arith.addf %171, %172 : vector<8x64xf32>
    %174 = math.tanh %173 : vector<8x64xf32>
    %175 = arith.mulf %170, %174 : vector<8x64xf32>
    %176 = vector.extract_strided_slice %175 {offsets = [0, 32], sizes = [8, 32], strides = [1, 1]} : vector<8x64xf32> to vector<8x32xf32>
    %177 = arith.truncf %176 : vector<8x32xf32> to vector<8x32xbf16>
    %c0_34 = arith.constant 0 : index
    %c0_35 = arith.constant 0 : index
    %178 = vector.load %arg4[%c0_34, %c0_35] : memref<32x1xbf16, #tpu.memory_space<vmem>>, vector<32x1xbf16>
    %cst_36 = arith.constant dense<0.000000e+00> : vector<8x1xf32>
    %179 = tpu.matmul %177, %178, %cst_36 {dimension_numbers = #tpu.dot_dimension_numbers<[1], [0], [0], [1], [0, 0, 1, 1], [], []>} : vector<8x32xbf16>, vector<32x1xbf16>, vector<8x1xf32> -> vector<8x1xf32>
    %c0_37 = arith.constant 0 : index
    %c0_38 = arith.constant 0 : index
    %180 = vector.load %arg5[%c0_37, %c0_38] : memref<1x1xf32, #tpu.memory_space<vmem>>, vector<1x1xf32>
    %181 = vector.broadcast %180 : vector<1x1xf32> to vector<8x1xf32>
    %182 = arith.addf %179, %181 : vector<8x1xf32>
    %c0_39 = arith.constant 0 : index
    %c0_40 = arith.constant 0 : index
    %183 = vector.load %arg6[%c0_39, %c0_40] : memref<8x1xf32, #tpu.memory_space<vmem>>, vector<8x1xf32>
    tpu.vector_store %arg6[%c0_39, %c0_40], %182 {strides = array<i32>} : memref<8x1xf32, #tpu.memory_space<vmem>>, vector<8x1xf32>,
    return
  }
}

</mosaic_0001>

<llo_original>
// kernel: _lstm_forward.1
$region0: #{_lstm_forward.1}
  #allocation0 [shape = 'u32[]', space=smem, size = 0x4, offset = 0x4, fixed_abs, tag = 'smem constant byte address 0x4 - core index']
  #allocation1 [shape = 'u32[144,128]{1,0:T(1,128)}', space=vmem, size = 0x12000, scoped, tag = 'internal scratch']
  #allocation2 [shape = 'f32[1,1]{1,0:T(1,128)S(1)}', space=vmem, size = 0x200, scoped, tag = 'scoped memory for _lstm_forward.1']
  %s0 = inlined_call_operand.vmem [shape: bf16[64,8], index: 0, kind: input, shape index: {}]
  %s1 = inlined_call_operand.vmem [shape: bf16[8,256], index: 1, kind: input, shape index: {}]
  %s2 = inlined_call_operand.vmem [shape: bf16[64,256], index: 2, kind: input, shape index: {}]
  %s3 = inlined_call_operand.vmem [shape: f32[1,256], index: 3, kind: input, shape index: {}]
  %s4 = inlined_call_operand.vmem [shape: bf16[32,1], index: 4, kind: input, shape index: {}]
  %s5 = inlined_call_operand.<no memory space> [shape: f32[1,1], index: 5, kind: input, shape index: {}]
  %s6 = inlined_call_operand.vmem [shape: f32[8,1], index: 6, kind: output, shape index: {}]
  %s7 = sld [smem:[#allocation0]]
  $region34: #{_lstm_forward.1} parent=0
    _
  %s9 = ssub.s32 1, %s7
  %s10 = scalar_select 0, %s9, %s7
  %v11 = vstv %s5
  %12 = vst [vmem:[#allocation2] sm:$0x1] %v11
  // Predicated region
  $region2: #{_lstm_forward.1} parent=0 // pred_check
    _
  $region3: #{_lstm_forward.1} parent=0 // pred_check_branch
    %14 = sbr.rel (0) target = $region5
  $region4: #{_lstm_forward.1} parent=0 // pred_region
    _
  $region5: #{_lstm_forward.1} parent=0 // pred_fallthru
    _
  // Predicated region
  $region6: #{_lstm_forward.1} parent=0 // pred_check
    _
  $region7: #{_lstm_forward.1} parent=0 // pred_check_branch
    %16 = sbr.rel (0) target = $region9
  $region8: #{_lstm_forward.1} parent=0 // pred_region
    _
  $region9: #{_lstm_forward.1} parent=0 // pred_fallthru
    _
  // Predicated region
  $region10: #{_lstm_forward.1} parent=0 // pred_check
    _
  $region11: #{_lstm_forward.1} parent=0 // pred_check_branch
    %18 = sbr.rel (0) target = $region13
  $region12: #{_lstm_forward.1} parent=0 // pred_region
    _
  $region13: #{_lstm_forward.1} parent=0 // pred_fallthru
    _
  // Predicated region
  $region14: #{_lstm_forward.1} parent=0 // pred_check
    _
  $region15: #{_lstm_forward.1} parent=0 // pred_check_branch
    %20 = sbr.rel (0) target = $region17
  $region16: #{_lstm_forward.1} parent=0 // pred_region
    _
  $region17: #{_lstm_forward.1} parent=0 // pred_fallthru
    _
  // Predicated region
  $region18: #{_lstm_forward.1} parent=0 // pred_check
    _
  $region19: #{_lstm_forward.1} parent=0 // pred_check_branch
    %22 = sbr.rel (0) target = $region21
  $region20: #{_lstm_forward.1} parent=0 // pred_region
    _
  $region21: #{_lstm_forward.1} parent=0 // pred_fallthru
    _
  // Predicated region
  $region22: #{_lstm_forward.1} parent=0 // pred_check
    _
  $region23: #{_lstm_forward.1} parent=0 // pred_check_branch
    %24 = sbr.rel (0) target = $region25
  $region24: #{_lstm_forward.1} parent=0 // pred_region
    _
  $region25: #{_lstm_forward.1} parent=0 // pred_fallthru
    _
  %v26 = vld [vmem:[%s3] sm:$0x3]
  %v27 = vld [vmem:[%s0] sm:$0xf]
  %v28 = vld [vmem:[%s0 + $0x4] sm:$0xf]
  %v29 = vld [vmem:[%s0 + $0x8] sm:$0xf]
  %v30 = vld [vmem:[%s0 + $0xc] sm:$0xf]
  %v31 = vld [vmem:[%s0 + $0x10] sm:$0xf]
  %v32 = vld [vmem:[%s0 + $0x14] sm:$0xf]
  %v33 = vld [vmem:[%s0 + $0x18] sm:$0xf]
  %v34 = vld [vmem:[%s0 + $0x1c] sm:$0xf]
  %v35 = vld [vmem:[%s1] sm:$0xff]
  %v37 = vlaneseq
  %v38 = vshrl.u32 %v37, 7
  %v39 = vsub.s32 0, %v38
  %v40 = vrot.slane %v26, %v39
  %v41 = vlaneseq
  %v42 = vshrl.u32 %v41, 7
  %v43 = vsub.s32 1, %v42
  %v44 = vrot.slane %v26, %v43
  %v55 = vunpack.c.l.b16 %v27
  %v56 = vunpack.c.l.b16 %v28
  %v57 = vunpack.c.l.b16 %v29
  %v58 = vunpack.c.l.b16 %v30
  %v59 = vunpack.c.l.b16 %v31
  %v60 = vunpack.c.l.b16 %v32
  %v61 = vunpack.c.l.b16 %v33
  %v62 = vunpack.c.l.b16 %v34
  %v63 = vpack.c.b16 %v56, %v55
  %v64 = vpack.c.b16 %v58, %v57
  %v65 = vpack.c.b16 %v60, %v59
  %v66 = vpack.c.b16 %v62, %v61
  %v68 = vunpack.c.l.b16 %v35
  %v69 = vunpack.c.h.b16 %v35
  %v70 = vpack.c.b16 %v68, %v68
  %v71 = vpack.c.b16 %v69, %v69
  %vm72 = vcmask 64512
  %v74 = vsel %vm72, %v63, 0
  %v77 = vsel %vm72, %v64, 0
  %v80 = vsel %vm72, %v65, 0
  %v83 = vsel %vm72, %v66, 0
  %vm85 = vcmask 1043456
  %v87 = vsel %vm85, %v70, 0
  %v90 = vsel %vm85, %v71, 0
  %92 = vmatprep.subr.bf16.mxu0 %v90
  %93 = vmatpush1.bf16.msra.mxu0 %v87
  %94 = vmatprep.subr.bf16.mxu0 0
  %95 = vmatpush1.bf16.msra.mxu0 0
  %96 = vmatprep.subr.bf16.mxu0 0
  %97 = vmatpush1.bf16.msra.mxu0 0
  %98 = vmatprep.subr.bf16.mxu0 0
  %99 = vmatpush1.bf16.msra.mxu0 0
  %100 = vmatprep.subr.bf16.mxu0 0
  %101 = vmatpush1.bf16.msra.mxu0 0
  %102 = vmatprep.subr.bf16.mxu0 0
  %103 = vmatpush1.bf16.msra.mxu0 0
  %104 = vmatprep.subr.bf16.mxu0 0
  %105 = vmatpush1.bf16.msra.mxu0 0
  %106 = vmatprep.subr.bf16.mxu0 0
  %107 = vmatpush1.bf16.msra.mxu0 0
  %108 = vmatprep.subr.bf16.mxu0 0
  %109 = vmatpush1.bf16.msra.mxu0 0
  %110 = vmatprep.subr.bf16.mxu0 0
  %111 = vmatpush1.bf16.msra.mxu0 0
  %112 = vmatprep.subr.bf16.mxu0 0
  %113 = vmatpush1.bf16.msra.mxu0 0
  %114 = vmatprep.subr.bf16.mxu0 0
  %115 = vmatpush1.bf16.msra.mxu0 0
  %116 = vmatprep.subr.bf16.mxu0 0
  %117 = vmatpush1.bf16.msra.mxu0 0
  %118 = vmatprep.subr.bf16.mxu0 0
  %119 = vmatpush1.bf16.msra.mxu0 0
  %120 = vmatprep.subr.bf16.mxu0 0
  %121 = vmatpush1.bf16.msra.mxu0 0
  %122 = vmatprep.subr.bf16.mxu0 0
  %123 = vmatpush1.bf16.msra.mxu0 0
  %124 = vmatprep.mubr.bf16.mxu0 0
  %125 = vmatmul.mubr.bf16.gmra.mrb[0].mxu0 %v74
  %v126 = vpop.f32.mrb[0].mxu0
  %v127 = vadd.f32 %v40, %v126
  %v128 = vpop.f32.mrb[0].mxu0
  %v129 = vadd.f32 %v44, %v128
  %v130 = vpop.f32.mrb[0].mxu0
  %v131 = vadd.f32 %v40, %v130
  %v132 = vpop.f32.mrb[0].mxu0
  %v133 = vadd.f32 %v44, %v132
  %134 = vmatprep.mubr.bf16.mxu0 0
  %135 = vmatmul.mubr.bf16.gmra.mrb[0].mxu0 %v77
  %v136 = vpop.f32.mrb[0].mxu0
  %v137 = vadd.f32 %v40, %v136
  %v138 = vpop.f32.mrb[0].mxu0
  %v139 = vadd.f32 %v44, %v138
  %v140 = vpop.f32.mrb[0].mxu0
  %v141 = vadd.f32 %v40, %v140
  %v142 = vpop.f32.mrb[0].mxu0
  %v143 = vadd.f32 %v44, %v142
  %144 = vmatprep.mubr.bf16.mxu0 0
  %145 = vmatmul.mubr.bf16.gmra.mrb[0].mxu0 %v80
  %v146 = vpop.f32.mrb[0].mxu0
  %v147 = vadd.f32 %v40, %v146
  %v148 = vpop.f32.mrb[0].mxu0
  %v149 = vadd.f32 %v44, %v148
  %v150 = vpop.f32.mrb[0].mxu0
  %v151 = vadd.f32 %v40, %v150
  %v152 = vpop.f32.mrb[0].mxu0
  %v153 = vadd.f32 %v44, %v152
  %154 = vmatprep.mubr.bf16.mxu0 0
  %155 = vmatmul.mubr.bf16.gmra.mrb[0].mxu0 %v83
  %v156 = vpop.f32.mrb[0].mxu0
  %v157 = vadd.f32 %v40, %v156
  %v158 = vpop.f32.mrb[0].mxu0
  %v159 = vadd.f32 %v44, %v158
  %v160 = vpop.f32.mrb[0].mxu0
  %v161 = vadd.f32 %v40, %v160
  %v162 = vpop.f32.mrb[0].mxu0
  %v163 = vadd.f32 %v44, %v162
  %164 = vdwg.mxu0
  %v165 = vld [vmem:[%s2] sm:$0xff]
  %v166 = vld [vmem:[%s2 + $0x8] sm:$0xff]
  %v167 = vld [vmem:[%s2 + $0x10] sm:$0xff]
  %v168 = vld [vmem:[%s2 + $0x18] sm:$0xff]
  %v169 = vld [vmem:[%s2 + $0x20] sm:$0xff]
  %v170 = vld [vmem:[%s2 + $0x28] sm:$0xff]
  %v171 = vld [vmem:[%s2 + $0x30] sm:$0xff]
  %v172 = vld [vmem:[%s2 + $0x38] sm:$0xff]
  %v173 = vlaneseq
  %v174 = vand.u32 %v173, 127
  %vm175 = vcmp.lt.s32.totalorder %v174, 32
  %v176 = vsel %vm175, 1, 0
  %v177 = vcvt.s32.f32 %v176
  %v178 = vtanh.pop %v127
  %v179 = vtanh.pop %v129
  %v180 = vmul.f32 %v178, 0.5
  %v181 = vmul.f32 %v179, 0.5
  %v182 = vadd.f32 %v180, 0.5
  %v183 = vadd.f32 %v181, 0.5
  %v184 = vmul.f32 %v182, 0.0
  %v185 = vmul.f32 %v182, %v179
  %187 = vrot.lane.b32.xlu0 %v185, 64
  %v188 = vpop.permute.xlu0 %187
  %v190 = vadd.f32 %v184, %v188
  %v191 = vtanh.pop %v190
  %v192 = vmul.f32 %v183, %v191
  %194 = vrot.lane.b32.xlu0 %v177, 64
  %v195 = vpop.permute.xlu0 %194
  %v197 = vmul.f32 %v190, %v195
  %v198 = vmul.f32 %v192, %v195
  %v199 = vpack.c.bf16 %v198, %v198
  %201 = vrot.lane.b32.xlu0 %v199, 64
  %v202 = vpop.permute.xlu0 %201
  %v211 = vunpack.c.l.b16 %v165
  %v212 = vunpack.c.h.b16 %v165
  %v213 = vunpack.c.l.b16 %v166
  %v214 = vunpack.c.h.b16 %v166
  %v215 = vunpack.c.l.b16 %v167
  %v216 = vunpack.c.h.b16 %v167
  %v217 = vunpack.c.l.b16 %v168
  %v218 = vunpack.c.h.b16 %v168
  %v219 = vunpack.c.l.b16 %v169
  %v220 = vunpack.c.h.b16 %v169
  %v221 = vunpack.c.l.b16 %v170
  %v222 = vunpack.c.h.b16 %v170
  %v223 = vunpack.c.l.b16 %v171
  %v224 = vunpack.c.h.b16 %v171
  %v225 = vunpack.c.l.b16 %v172
  %v226 = vunpack.c.h.b16 %v172
  %v227 = vpack.c.b16 %v213, %v211
  %v228 = vpack.c.b16 %v214, %v212
  %v229 = vpack.c.b16 %v217, %v215
  %v230 = vpack.c.b16 %v218, %v216
  %v231 = vpack.c.b16 %v221, %v219
  %v232 = vpack.c.b16 %v222, %v220
  %v233 = vpack.c.b16 %v225, %v223
  %v234 = vpack.c.b16 %v226, %v224
  %vm243 = vcmask 523264
  %v245 = vsel %vm243, %v202, 0
  %247 = vmatprep.subr.bf16.mxu0 %v228
  %248 = vmatpush1.bf16.msra.mxu0 %v227
  %249 = vmatprep.subr.bf16.mxu0 %v230
  %250 = vmatpush1.bf16.msra.mxu0 %v229
  %251 = vmatprep.subr.bf16.mxu0 %v232
  %252 = vmatpush1.bf16.msra.mxu0 %v231
  %253 = vmatprep.subr.bf16.mxu0 %v234
  %254 = vmatpush1.bf16.msra.mxu0 %v233
  %255 = vmatprep.subr.bf16.mxu0 0
  %256 = vmatpush1.bf16.msra.mxu0 0
  %257 = vmatprep.subr.bf16.mxu0 0
  %258 = vmatpush1.bf16.msra.mxu0 0
  %259 = vmatprep.subr.bf16.mxu0 0
  %260 = vmatpush1.bf16.msra.mxu0 0
  %261 = vmatprep.subr.bf16.mxu0 0
  %262 = vmatpush1.bf16.msra.mxu0 0
  %263 = vmatprep.subr.bf16.mxu0 0
  %264 = vmatpush1.bf16.msra.mxu0 0
  %265 = vmatprep.subr.bf16.mxu0 0
  %266 = vmatpush1.bf16.msra.mxu0 0
  %267 = vmatprep.subr.bf16.mxu0 0
  %268 = vmatpush1.bf16.msra.mxu0 0
  %269 = vmatprep.subr.bf16.mxu0 0
  %270 = vmatpush1.bf16.msra.mxu0 0
  %271 = vmatprep.subr.bf16.mxu0 0
  %272 = vmatpush1.bf16.msra.mxu0 0
  %273 = vmatprep.subr.bf16.mxu0 0
  %274 = vmatpush1.bf16.msra.mxu0 0
  %275 = vmatprep.subr.bf16.mxu0 0
  %276 = vmatpush1.bf16.msra.mxu0 0
  %277 = vmatprep.subr.bf16.mxu0 0
  %278 = vmatpush1.bf16.msra.mxu0 0
  %279 = vmatprep.mubr.bf16.mxu0 0
  %280 = vmatmul.mubr.bf16.gmra.mrb[0].mxu0 %v245
  %v281 = vpop.f32.mrb[0].mxu0
  %v282 = vadd.f32 %v131, %v281
  %v283 = vpop.f32.mrb[0].mxu0
  %v284 = vadd.f32 %v133, %v283
  %v285 = vpop.f32.mrb[0].mxu0
  %v286 = vpop.f32.mrb[0].mxu0
  %287 = vdwg.mxu0
  %v288 = vtanh.pop %v282
  %v289 = vtanh.pop %v284
  %v290 = vmul.f32 %v288, 0.5
  %v291 = vmul.f32 %v289, 0.5
  %v292 = vadd.f32 %v290, 0.5
  %v293 = vadd.f32 %v291, 0.5
  %v294 = vmul.f32 %v292, %v197
  %v295 = vmul.f32 %v292, %v289
  %297 = vrot.lane.b32.xlu0 %v295, 64
  %v298 = vpop.permute.xlu0 %297
  %v300 = vadd.f32 %v294, %v298
  %v301 = vtanh.pop %v300
  %v302 = vmul.f32 %v293, %v301
  %v303 = vpack.c.bf16 %v302, %v302
  %305 = vrot.lane.b32.xlu0 %v303, 64
  %v306 = vpop.permute.xlu0 %305
  %v308 = vsel %vm243, %v306, 0
  %310 = vmatprep.subr.bf16.mxu0 %v228
  %311 = vmatpush1.bf16.msra.mxu0 %v227
  %312 = vmatprep.subr.bf16.mxu0 %v230
  %313 = vmatpush1.bf16.msra.mxu0 %v229
  %314 = vmatprep.subr.bf16.mxu0 %v232
  %315 = vmatpush1.bf16.msra.mxu0 %v231
  %316 = vmatprep.subr.bf16.mxu0 %v234
  %317 = vmatpush1.bf16.msra.mxu0 %v233
  %318 = vmatprep.subr.bf16.mxu0 0
  %319 = vmatpush1.bf16.msra.mxu0 0
  %320 = vmatprep.subr.bf16.mxu0 0
  %321 = vmatpush1.bf16.msra.mxu0 0
  %322 = vmatprep.subr.bf16.mxu0 0
  %323 = vmatpush1.bf16.msra.mxu0 0
  %324 = vmatprep.subr.bf16.mxu0 0
  %325 = vmatpush1.bf16.msra.mxu0 0
  %326 = vmatprep.subr.bf16.mxu0 0
  %327 = vmatpush1.bf16.msra.mxu0 0
  %328 = vmatprep.subr.bf16.mxu0 0
  %329 = vmatpush1.bf16.msra.mxu0 0
  %330 = vmatprep.subr.bf16.mxu0 0
  %331 = vmatpush1.bf16.msra.mxu0 0
  %332 = vmatprep.subr.bf16.mxu0 0
  %333 = vmatpush1.bf16.msra.mxu0 0
  %334 = vmatprep.subr.bf16.mxu0 0
  %335 = vmatpush1.bf16.msra.mxu0 0
  %336 = vmatprep.subr.bf16.mxu0 0
  %337 = vmatpush1.bf16.msra.mxu0 0
  %338 = vmatprep.subr.bf16.mxu0 0
  %339 = vmatpush1.bf16.msra.mxu0 0
  %340 = vmatprep.subr.bf16.mxu0 0
  %341 = vmatpush1.bf16.msra.mxu0 0
  %342 = vmatprep.mubr.bf16.mxu0 0
  %343 = vmatmul.mubr.bf16.gmra.mrb[0].mxu0 %v308
  %v344 = vpop.f32.mrb[0].mxu0
  %v345 = vadd.f32 %v137, %v344
  %v346 = vpop.f32.mrb[0].mxu0
  %v347 = vadd.f32 %v139, %v346
  %v348 = vpop.f32.mrb[0].mxu0
  %v349 = vpop.f32.mrb[0].mxu0
  %350 = vdwg.mxu0
  %v351 = vtanh.pop %v345
  %v352 = vtanh.pop %v347
  %v353 = vmul.f32 %v351, 0.5
  %v354 = vmul.f32 %v352, 0.5
  %v355 = vadd.f32 %v353, 0.5
  %v356 = vadd.f32 %v354, 0.5
  %v357 = vmul.f32 %v355, %v300
  %v358 = vmul.f32 %v355, %v352
  %360 = vrot.lane.b32.xlu0 %v358, 64
  %v361 = vpop.permute.xlu0 %360
  %v363 = vadd.f32 %v357, %v361
  %v364 = vtanh.pop %v363
  %v365 = vmul.f32 %v356, %v364
  %v366 = vpack.c.bf16 %v365, %v365
  %368 = vrot.lane.b32.xlu0 %v366, 64
  %v369 = vpop.permute.xlu0 %368
  %v371 = vsel %vm243, %v369, 0
  %373 = vmatprep.subr.bf16.mxu0 %v228
  %374 = vmatpush1.bf16.msra.mxu0 %v227
  %375 = vmatprep.subr.bf16.mxu0 %v230
  %376 = vmatpush1.bf16.msra.mxu0 %v229
  %377 = vmatprep.subr.bf16.mxu0 %v232
  %378 = vmatpush1.bf16.msra.mxu0 %v231
  %379 = vmatprep.subr.bf16.mxu0 %v234
  %380 = vmatpush1.bf16.msra.mxu0 %v233
  %381 = vmatprep.subr.bf16.mxu0 0
  %382 = vmatpush1.bf16.msra.mxu0 0
  %383 = vmatprep.subr.bf16.mxu0 0
  %384 = vmatpush1.bf16.msra.mxu0 0
  %385 = vmatprep.subr.bf16.mxu0 0
  %386 = vmatpush1.bf16.msra.mxu0 0
  %387 = vmatprep.subr.bf16.mxu0 0
  %388 = vmatpush1.bf16.msra.mxu0 0
  %389 = vmatprep.subr.bf16.mxu0 0
  %390 = vmatpush1.bf16.msra.mxu0 0
  %391 = vmatprep.subr.bf16.mxu0 0
  %392 = vmatpush1.bf16.msra.mxu0 0
  %393 = vmatprep.subr.bf16.mxu0 0
  %394 = vmatpush1.bf16.msra.mxu0 0
  %395 = vmatprep.subr.bf16.mxu0 0
  %396 = vmatpush1.bf16.msra.mxu0 0
  %397 = vmatprep.subr.bf16.mxu0 0
  %398 = vmatpush1.bf16.msra.mxu0 0
  %399 = vmatprep.subr.bf16.mxu0 0
  %400 = vmatpush1.bf16.msra.mxu0 0
  %401 = vmatprep.subr.bf16.mxu0 0
  %402 = vmatpush1.bf16.msra.mxu0 0
  %403 = vmatprep.subr.bf16.mxu0 0
  %404 = vmatpush1.bf16.msra.mxu0 0
  %405 = vmatprep.mubr.bf16.mxu0 0
  %406 = vmatmul.mubr.bf16.gmra.mrb[0].mxu0 %v371
  %v407 = vpop.f32.mrb[0].mxu0
  %v408 = vadd.f32 %v141, %v407
  %v409 = vpop.f32.mrb[0].mxu0
  %v410 = vadd.f32 %v143, %v409
  %v411 = vpop.f32.mrb[0].mxu0
  %v412 = vpop.f32.mrb[0].mxu0
  %413 = vdwg.mxu0
  %v414 = vtanh.pop %v408
  %v415 = vtanh.pop %v410
  %v416 = vmul.f32 %v414, 0.5
  %v417 = vmul.f32 %v415, 0.5
  %v418 = vadd.f32 %v416, 0.5
  %v419 = vadd.f32 %v417, 0.5
  %v420 = vmul.f32 %v418, %v363
  %v421 = vmul.f32 %v418, %v415
  %423 = vrot.lane.b32.xlu0 %v421, 64
  %v424 = vpop.permute.xlu0 %423
  %v426 = vadd.f32 %v420, %v424
  %v427 = vtanh.pop %v426
  %v428 = vmul.f32 %v419, %v427
  %v429 = vpack.c.bf16 %v428, %v428
  %431 = vrot.lane.b32.xlu0 %v429, 64
  %v432 = vpop.permute.xlu0 %431
  %v434 = vsel %vm243, %v432, 0
  %436 = vmatprep.subr.bf16.mxu0 %v228
  %437 = vmatpush1.bf16.msra.mxu0 %v227
  %438 = vmatprep.subr.bf16.mxu0 %v230
  %439 = vmatpush1.bf16.msra.mxu0 %v229
  %440 = vmatprep.subr.bf16.mxu0 %v232
  %441 = vmatpush1.bf16.msra.mxu0 %v231
  %442 = vmatprep.subr.bf16.mxu0 %v234
  %443 = vmatpush1.bf16.msra.mxu0 %v233
  %444 = vmatprep.subr.bf16.mxu0 0
  %445 = vmatpush1.bf16.msra.mxu0 0
  %446 = vmatprep.subr.bf16.mxu0 0
  %447 = vmatpush1.bf16.msra.mxu0 0
  %448 = vmatprep.subr.bf16.mxu0 0
  %449 = vmatpush1.bf16.msra.mxu0 0
  %450 = vmatprep.subr.bf16.mxu0 0
  %451 = vmatpush1.bf16.msra.mxu0 0
  %452 = vmatprep.subr.bf16.mxu0 0
  %453 = vmatpush1.bf16.msra.mxu0 0
  %454 = vmatprep.subr.bf16.mxu0 0
  %455 = vmatpush1.bf16.msra.mxu0 0
  %456 = vmatprep.subr.bf16.mxu0 0
  %457 = vmatpush1.bf16.msra.mxu0 0
  %458 = vmatprep.subr.bf16.mxu0 0
  %459 = vmatpush1.bf16.msra.mxu0 0
  %460 = vmatprep.subr.bf16.mxu0 0
  %461 = vmatpush1.bf16.msra.mxu0 0
  %462 = vmatprep.subr.bf16.mxu0 0
  %463 = vmatpush1.bf16.msra.mxu0 0
  %464 = vmatprep.subr.bf16.mxu0 0
  %465 = vmatpush1.bf16.msra.mxu0 0
  %466 = vmatprep.subr.bf16.mxu0 0
  %467 = vmatpush1.bf16.msra.mxu0 0
  %468 = vmatprep.mubr.bf16.mxu0 0
  %469 = vmatmul.mubr.bf16.gmra.mrb[0].mxu0 %v434
  %v470 = vpop.f32.mrb[0].mxu0
  %v471 = vadd.f32 %v147, %v470
  %v472 = vpop.f32.mrb[0].mxu0
  %v473 = vadd.f32 %v149, %v472
  %v474 = vpop.f32.mrb[0].mxu0
  %v475 = vpop.f32.mrb[0].mxu0
  %476 = vdwg.mxu0
  %v477 = vtanh.pop %v471
  %v478 = vtanh.pop %v473
  %v479 = vmul.f32 %v477, 0.5
  %v480 = vmul.f32 %v478, 0.5
  %v481 = vadd.f32 %v479, 0.5
  %v482 = vadd.f32 %v480, 0.5
  %v483 = vmul.f32 %v481, %v426
  %v484 = vmul.f32 %v481, %v478
  %486 = vrot.lane.b32.xlu0 %v484, 64
  %v487 = vpop.permute.xlu0 %486
  %v489 = vadd.f32 %v483, %v487
  %v490 = vtanh.pop %v489
  %v491 = vmul.f32 %v482, %v490
  %v492 = vpack.c.bf16 %v491, %v491
  %494 = vrot.lane.b32.xlu0 %v492, 64
  %v495 = vpop.permute.xlu0 %494
  %v497 = vsel %vm243, %v495, 0
  %499 = vmatprep.subr.bf16.mxu0 %v228
  %500 = vmatpush1.bf16.msra.mxu0 %v227
  %501 = vmatprep.subr.bf16.mxu0 %v230
  %502 = vmatpush1.bf16.msra.mxu0 %v229
  %503 = vmatprep.subr.bf16.mxu0 %v232
  %504 = vmatpush1.bf16.msra.mxu0 %v231
  %505 = vmatprep.subr.bf16.mxu0 %v234
  %506 = vmatpush1.bf16.msra.mxu0 %v233
  %507 = vmatprep.subr.bf16.mxu0 0
  %508 = vmatpush1.bf16.msra.mxu0 0
  %509 = vmatprep.subr.bf16.mxu0 0
  %510 = vmatpush1.bf16.msra.mxu0 0
  %511 = vmatprep.subr.bf16.mxu0 0
  %512 = vmatpush1.bf16.msra.mxu0 0
  %513 = vmatprep.subr.bf16.mxu0 0
  %514 = vmatpush1.bf16.msra.mxu0 0
  %515 = vmatprep.subr.bf16.mxu0 0
  %516 = vmatpush1.bf16.msra.mxu0 0
  %517 = vmatprep.subr.bf16.mxu0 0
  %518 = vmatpush1.bf16.msra.mxu0 0
  %519 = vmatprep.subr.bf16.mxu0 0
  %520 = vmatpush1.bf16.msra.mxu0 0
  %521 = vmatprep.subr.bf16.mxu0 0
  %522 = vmatpush1.bf16.msra.mxu0 0
  %523 = vmatprep.subr.bf16.mxu0 0
  %524 = vmatpush1.bf16.msra.mxu0 0
  %525 = vmatprep.subr.bf16.mxu0 0
  %526 = vmatpush1.bf16.msra.mxu0 0
  %527 = vmatprep.subr.bf16.mxu0 0
  %528 = vmatpush1.bf16.msra.mxu0 0
  %529 = vmatprep.subr.bf16.mxu0 0
  %530 = vmatpush1.bf16.msra.mxu0 0
  %531 = vmatprep.mubr.bf16.mxu0 0
  %532 = vmatmul.mubr.bf16.gmra.mrb[0].mxu0 %v497
  %v533 = vpop.f32.mrb[0].mxu0
  %v534 = vadd.f32 %v151, %v533
  %v535 = vpop.f32.mrb[0].mxu0
  %v536 = vadd.f32 %v153, %v535
  %v537 = vpop.f32.mrb[0].mxu0
  %v538 = vpop.f32.mrb[0].mxu0
  %539 = vdwg.mxu0
  %v540 = vtanh.pop %v534
  %v541 = vtanh.pop %v536
  %v542 = vmul.f32 %v540, 0.5
  %v543 = vmul.f32 %v541, 0.5
  %v544 = vadd.f32 %v542, 0.5
  %v545 = vadd.f32 %v543, 0.5
  %v546 = vmul.f32 %v544, %v489
  %v547 = vmul.f32 %v544, %v541
  %549 = vrot.lane.b32.xlu0 %v547, 64
  %v550 = vpop.permute.xlu0 %549
  %v552 = vadd.f32 %v546, %v550
  %v553 = vtanh.pop %v552
  %v554 = vmul.f32 %v545, %v553
  %v555 = vpack.c.bf16 %v554, %v554
  %557 = vrot.lane.b32.xlu0 %v555, 64
  %v558 = vpop.permute.xlu0 %557
  %v560 = vsel %vm243, %v558, 0
  %562 = vmatprep.subr.bf16.mxu0 %v228
  %563 = vmatpush1.bf16.msra.mxu0 %v227
  %564 = vmatprep.subr.bf16.mxu0 %v230
  %565 = vmatpush1.bf16.msra.mxu0 %v229
  %566 = vmatprep.subr.bf16.mxu0 %v232
  %567 = vmatpush1.bf16.msra.mxu0 %v231
  %568 = vmatprep.subr.bf16.mxu0 %v234
  %569 = vmatpush1.bf16.msra.mxu0 %v233
  %570 = vmatprep.subr.bf16.mxu0 0
  %571 = vmatpush1.bf16.msra.mxu0 0
  %572 = vmatprep.subr.bf16.mxu0 0
  %573 = vmatpush1.bf16.msra.mxu0 0
  %574 = vmatprep.subr.bf16.mxu0 0
  %575 = vmatpush1.bf16.msra.mxu0 0
  %576 = vmatprep.subr.bf16.mxu0 0
  %577 = vmatpush1.bf16.msra.mxu0 0
  %578 = vmatprep.subr.bf16.mxu0 0
  %579 = vmatpush1.bf16.msra.mxu0 0
  %580 = vmatprep.subr.bf16.mxu0 0
  %581 = vmatpush1.bf16.msra.mxu0 0
  %582 = vmatprep.subr.bf16.mxu0 0
  %583 = vmatpush1.bf16.msra.mxu0 0
  %584 = vmatprep.subr.bf16.mxu0 0
  %585 = vmatpush1.bf16.msra.mxu0 0
  %586 = vmatprep.subr.bf16.mxu0 0
  %587 = vmatpush1.bf16.msra.mxu0 0
  %588 = vmatprep.subr.bf16.mxu0 0
  %589 = vmatpush1.bf16.msra.mxu0 0
  %590 = vmatprep.subr.bf16.mxu0 0
  %591 = vmatpush1.bf16.msra.mxu0 0
  %592 = vmatprep.subr.bf16.mxu0 0
  %593 = vmatpush1.bf16.msra.mxu0 0
  %594 = vmatprep.mubr.bf16.mxu0 0
  %595 = vmatmul.mubr.bf16.gmra.mrb[0].mxu0 %v560
  %v596 = vpop.f32.mrb[0].mxu0
  %v597 = vadd.f32 %v157, %v596
  %v598 = vpop.f32.mrb[0].mxu0
  %v599 = vadd.f32 %v159, %v598
  %v600 = vpop.f32.mrb[0].mxu0
  %v601 = vpop.f32.mrb[0].mxu0
  %602 = vdwg.mxu0
  %v603 = vtanh.pop %v597
  %v604 = vtanh.pop %v599
  %v605 = vmul.f32 %v603, 0.5
  %v606 = vmul.f32 %v604, 0.5
  %v607 = vadd.f32 %v605, 0.5
  %v608 = vadd.f32 %v606, 0.5
  %v609 = vmul.f32 %v607, %v552
  %v610 = vmul.f32 %v607, %v604
  %612 = vrot.lane.b32.xlu0 %v610, 64
  %v613 = vpop.permute.xlu0 %612
  %v615 = vadd.f32 %v609, %v613
  %v616 = vtanh.pop %v615
  %v617 = vmul.f32 %v608, %v616
  %v618 = vpack.c.bf16 %v617, %v617
  %620 = vrot.lane.b32.xlu0 %v618, 64
  %v621 = vpop.permute.xlu0 %620
  %v623 = vsel %vm243, %v621, 0
  %625 = vmatprep.subr.bf16.mxu0 %v228
  %626 = vmatpush1.bf16.msra.mxu0 %v227
  %627 = vmatprep.subr.bf16.mxu0 %v230
  %628 = vmatpush1.bf16.msra.mxu0 %v229
  %629 = vmatprep.subr.bf16.mxu0 %v232
  %630 = vmatpush1.bf16.msra.mxu0 %v231
  %631 = vmatprep.subr.bf16.mxu0 %v234
  %632 = vmatpush1.bf16.msra.mxu0 %v233
  %633 = vmatprep.subr.bf16.mxu0 0
  %634 = vmatpush1.bf16.msra.mxu0 0
  %635 = vmatprep.subr.bf16.mxu0 0
  %636 = vmatpush1.bf16.msra.mxu0 0
  %637 = vmatprep.subr.bf16.mxu0 0
  %638 = vmatpush1.bf16.msra.mxu0 0
  %639 = vmatprep.subr.bf16.mxu0 0
  %640 = vmatpush1.bf16.msra.mxu0 0
  %641 = vmatprep.subr.bf16.mxu0 0
  %642 = vmatpush1.bf16.msra.mxu0 0
  %643 = vmatprep.subr.bf16.mxu0 0
  %644 = vmatpush1.bf16.msra.mxu0 0
  %645 = vmatprep.subr.bf16.mxu0 0
  %646 = vmatpush1.bf16.msra.mxu0 0
  %647 = vmatprep.subr.bf16.mxu0 0
  %648 = vmatpush1.bf16.msra.mxu0 0
  %649 = vmatprep.subr.bf16.mxu0 0
  %650 = vmatpush1.bf16.msra.mxu0 0
  %651 = vmatprep.subr.bf16.mxu0 0
  %652 = vmatpush1.bf16.msra.mxu0 0
  %653 = vmatprep.subr.bf16.mxu0 0
  %654 = vmatpush1.bf16.msra.mxu0 0
  %655 = vmatprep.subr.bf16.mxu0 0
  %656 = vmatpush1.bf16.msra.mxu0 0
  %657 = vmatprep.mubr.bf16.mxu0 0
  %658 = vmatmul.mubr.bf16.gmra.mrb[0].mxu0 %v623
  %v659 = vpop.f32.mrb[0].mxu0
  %v660 = vadd.f32 %v161, %v659
  %v661 = vpop.f32.mrb[0].mxu0
  %v662 = vadd.f32 %v163, %v661
  %v663 = vpop.f32.mrb[0].mxu0
  %v664 = vpop.f32.mrb[0].mxu0
  %665 = vdwg.mxu0
  %v666 = vtanh.pop %v660
  %v667 = vtanh.pop %v662
  %v668 = vmul.f32 %v666, 0.5
  %v669 = vmul.f32 %v667, 0.5
  %v670 = vadd.f32 %v668, 0.5
  %v671 = vadd.f32 %v669, 0.5
  %v672 = vmul.f32 %v670, %v615
  %v673 = vmul.f32 %v670, %v667
  %675 = vrot.lane.b32.xlu0 %v673, 64
  %v676 = vpop.permute.xlu0 %675
  %v678 = vadd.f32 %v672, %v676
  %v679 = vtanh.pop %v678
  %v680 = vmul.f32 %v671, %v679
  %v681 = vpack.c.bf16 %v680, %v680
  %683 = vrot.lane.b32.xlu0 %v681, 64
  %v684 = vpop.permute.xlu0 %683
  %v686 = vsel %vm243, %v684, 0
  %688 = vmatprep.subr.bf16.mxu0 %v228
  %689 = vmatpush1.bf16.msra.mxu0 %v227
  %690 = vmatprep.subr.bf16.mxu0 %v230
  %691 = vmatpush1.bf16.msra.mxu0 %v229
  %692 = vmatprep.subr.bf16.mxu0 %v232
  %693 = vmatpush1.bf16.msra.mxu0 %v231
  %694 = vmatprep.subr.bf16.mxu0 %v234
  %695 = vmatpush1.bf16.msra.mxu0 %v233
  %696 = vmatprep.subr.bf16.mxu0 0
  %697 = vmatpush1.bf16.msra.mxu0 0
  %698 = vmatprep.subr.bf16.mxu0 0
  %699 = vmatpush1.bf16.msra.mxu0 0
  %700 = vmatprep.subr.bf16.mxu0 0
  %701 = vmatpush1.bf16.msra.mxu0 0
  %702 = vmatprep.subr.bf16.mxu0 0
  %703 = vmatpush1.bf16.msra.mxu0 0
  %704 = vmatprep.subr.bf16.mxu0 0
  %705 = vmatpush1.bf16.msra.mxu0 0
  %706 = vmatprep.subr.bf16.mxu0 0
  %707 = vmatpush1.bf16.msra.mxu0 0
  %708 = vmatprep.subr.bf16.mxu0 0
  %709 = vmatpush1.bf16.msra.mxu0 0
  %710 = vmatprep.subr.bf16.mxu0 0
  %711 = vmatpush1.bf16.msra.mxu0 0
  %712 = vmatprep.subr.bf16.mxu0 0
  %713 = vmatpush1.bf16.msra.mxu0 0
  %714 = vmatprep.subr.bf16.mxu0 0
  %715 = vmatpush1.bf16.msra.mxu0 0
  %716 = vmatprep.subr.bf16.mxu0 0
  %717 = vmatpush1.bf16.msra.mxu0 0
  %718 = vmatprep.subr.bf16.mxu0 0
  %719 = vmatpush1.bf16.msra.mxu0 0
  %720 = vmatprep.mubr.bf16.mxu0 0
  %721 = vmatmul.mubr.bf16.gmra.mrb[0].mxu0 %v686
  %v722 = vpop.f32.mrb[0].mxu0
  %v723 = vadd.f32 %v40, %v722
  %v724 = vpop.f32.mrb[0].mxu0
  %v725 = vadd.f32 %v44, %v724
  %v726 = vpop.f32.mrb[0].mxu0
  %v727 = vpop.f32.mrb[0].mxu0
  %728 = vdwg.mxu0
  %v729 = vtanh.pop %v723
  %v730 = vtanh.pop %v725
  %v731 = vmul.f32 %v729, 0.5
  %v732 = vmul.f32 %v730, 0.5
  %v733 = vadd.f32 %v731, 0.5
  %v734 = vadd.f32 %v732, 0.5
  %v735 = vmul.f32 %v733, %v678
  %v736 = vmul.f32 %v733, %v730
  %738 = vrot.lane.b32.xlu0 %v736, 64
  %v739 = vpop.permute.xlu0 %738
  %v741 = vadd.f32 %v735, %v739
  %v742 = vtanh.pop %v741
  %v743 = vmul.f32 %v734, %v742
  %v744 = vpack.c.bf16 %v743, %v743
  %v745 = vld [vmem:[%s4] sm:$0xf]
  %v746 = vld [vmem:[%s4 + $0x4] sm:$0xf]
  %v747 = vld [vmem:[%s4 + $0x8] sm:$0xf]
  %v748 = vld [vmem:[%s4 + $0xc] sm:$0xf]
  %v749 = vld [vmem:[#allocation2] sm:$0x1]
  %v751 = vlaneseq
  %v752 = vshrl.u32 %v751, 7
  %v753 = vsub.s32 0, %v752
  %v754 = vrot.slane %v749, %v753
  %757 = vrot.lane.b32.xlu0 %v744, 32
  %v758 = vpop.permute.xlu0 %757
  %v763 = vunpack.c.l.b16 %v745
  %v764 = vunpack.c.l.b16 %v746
  %v765 = vunpack.c.l.b16 %v747
  %v766 = vunpack.c.l.b16 %v748
  %v767 = vpack.c.b16 %v764, %v763
  %v768 = vpack.c.b16 %v766, %v765
  %vm771 = vcmask 261120
  %v773 = vsel %vm771, %v758, 0
  %775 = vmatprep.subr.bf16.mxu0 0
  %776 = vmatpush1.bf16.msra.mxu0 %v767
  %777 = vmatprep.subr.bf16.mxu0 0
  %778 = vmatpush1.bf16.msra.mxu0 %v768
  %779 = vmatprep.subr.bf16.mxu0 0
  %780 = vmatpush1.bf16.msra.mxu0 0
  %781 = vmatprep.subr.bf16.mxu0 0
  %782 = vmatpush1.bf16.msra.mxu0 0
  %783 = vmatprep.subr.bf16.mxu0 0
  %784 = vmatpush1.bf16.msra.mxu0 0
  %785 = vmatprep.subr.bf16.mxu0 0
  %786 = vmatpush1.bf16.msra.mxu0 0
  %787 = vmatprep.subr.bf16.mxu0 0
  %788 = vmatpush1.bf16.msra.mxu0 0
  %789 = vmatprep.subr.bf16.mxu0 0
  %790 = vmatpush1.bf16.msra.mxu0 0
  %791 = vmatprep.subr.bf16.mxu0 0
  %792 = vmatpush1.bf16.msra.mxu0 0
  %793 = vmatprep.subr.bf16.mxu0 0
  %794 = vmatpush1.bf16.msra.mxu0 0
  %795 = vmatprep.subr.bf16.mxu0 0
  %796 = vmatpush1.bf16.msra.mxu0 0
  %797 = vmatprep.subr.bf16.mxu0 0
  %798 = vmatpush1.bf16.msra.mxu0 0
  %799 = vmatprep.subr.bf16.mxu0 0
  %800 = vmatpush1.bf16.msra.mxu0 0
  %801 = vmatprep.subr.bf16.mxu0 0
  %802 = vmatpush1.bf16.msra.mxu0 0
  %803 = vmatprep.subr.bf16.mxu0 0
  %804 = vmatpush1.bf16.msra.mxu0 0
  %805 = vmatprep.subr.bf16.mxu0 0
  %806 = vmatpush1.bf16.msra.mxu0 0
  %807 = vmatprep.mubr.bf16.mxu0 0
  %808 = vmatmul.mubr.bf16.gmra.mrb[0].mxu0 %v773
  %v809 = vpop.f32.mrb[0].mxu0
  %v810 = vadd.f32 %v754, %v809
  %v811 = vpop.f32.mrb[0].mxu0
  %v812 = vpop.f32.mrb[0].mxu0
  %v813 = vpop.f32.mrb[0].mxu0
  %814 = vdwg.mxu0
  %vm815 = vcmask 7168
  %816 = vst.msk [vmem:[%s6] sm:$0xff] %vm815, %v810
  // Predicated region
  $region26: #{_lstm_forward.1} parent=0 // pred_check
    _
  $region27: #{_lstm_forward.1} parent=0 // pred_check_branch
    %818 = sbr.rel (0) target = $region29
  $region28: #{_lstm_forward.1} parent=0 // pred_region
    _
  $region29: #{_lstm_forward.1} parent=0 // pred_fallthru
    _
  // Predicated region
  $region30: #{_lstm_forward.1} parent=0 // pred_check
    _
  $region31: #{_lstm_forward.1} parent=0 // pred_check_branch
    %820 = sbr.rel (0) target = $region33
  $region32: #{_lstm_forward.1} parent=0 // pred_region
    _
  $region33: #{_lstm_forward.1} parent=0 // pred_fallthru
    _

</llo_original>
